<compile_context>
chip_gen: v6e
topology: v6e:2x2x1
jax: 0.10.0
libtpu: 0.0.40
codegen_flags: <defaults>
</compile_context>

<pallas_src>
import jax
import jax.numpy as jnp
from jax import lax
from jax.experimental import pallas as pl
from jax.experimental.pallas import tpu as pltpu


def _pick_block_b(batch, max_bb=4):
    """Largest divisor of `batch` <= max_bb that still leaves >= 2 grid steps
    (so both TensorCores get work on v7x); falls back to 1 (or batch==1)."""
    cands = [bb for bb in range(1, min(batch, max_bb) + 1)
             if batch % bb == 0 and batch // bb >= 2]
    return max(cands) if cands else batch


def _make_kernel(Bb, Hz, Wz, Hx, Wx, compute_dtype):
    S, HW = Hz * Wz, Hx * Wx

    def _fold(V, n, group_rows, step):
        # V has n groups of `group_rows` rows; the t-th group still owes a
        # left-shift of t*step lanes (plus any per-row residual the caller
        # handles later).  Each iteration rolls the bottom ~half left by
        # (n - m)*step with ONE full-block lane rotation and adds it onto the
        # top half.  Left-roll by A == jnp.roll/pltpu.roll by (HW - A).
        # Wraparound is harmless: wrapped lanes only reach output positions
        # with p >= Ho or q >= Wo, which the wrapper crops.
        while n > 1:
            m = n // 2
            lo = (n - m) * group_rows
            folded = pltpu.roll(V[lo:n * group_rows, :],
                                HW - (n - m) * step, axis=1)
            if n % 2 == 0:
                V = V[:lo, :] + folded
            else:
                V = jnp.concatenate(
                    [V[:m * group_rows, :] + folded, V[m * group_rows:lo, :]],
                    axis=0)
            n -= m
        return V

    def kernel(z_ref, a_ref, x_ref, out_ref):
        # z_ref: (Bb, S, C) f32   -- channels-last template
        # a_ref: (Bb, 1, C) f32   -- precomputed channel-attention scale
        # x_ref: (Bb, C, HW) bf16 -- channels-first search, spatial on lanes
        # out_ref: (1, Bb, HW) f32
        for b in range(Bb):                      # static unroll, Bb is small
            # ---- channel-attention scale (lane-wise multiply) -----------
            zs = (z_ref[b] * a_ref[b]).astype(compute_dtype)      # (S, C)
            # ---- SiamFC cross-correlation: one MXU contraction over C ---
            U = jnp.dot(zs, x_ref[b],
                        preferred_element_type=jnp.float32)        # (S, HW)
            # score[m] = sum_{i,j} U[i*Wz+j, m + i*Wx + j]  (valid m only):
            # fold template rows (shift i*Wx), then template cols (shift j).
            V = _fold(U, Hz, Wz, Wx)                               # (Wz, HW)
            V = _fold(V, Wz, 1, 1)                                 # (1, HW)
            out_ref[0, b:b + 1, :] = V

    return kernel


def siamfc_forward(template, search, params, *, block_b=None,
                   compute_dtype=jnp.bfloat16):
    """template: (B,C,Hz,Wz), search: (B,C,Hx,Wx) -> score (B,1,Ho,Wo)."""
    B, C, Hz, Wz = template.shape
    Bx, Cx, Hx, Wx = search.shape
    assert B == Bx and C == Cx and Hz <= Hx and Wz <= Wx
    Ho, Wo = Hx - Hz + 1, Wx - Wz + 1
    S, HW = Hz * Wz, Hx * Wx

    # ---- Channel_attention_net head (tiny C->9->C MLP on a (B,C) vector) ---
    # Hoisted off the per-grid-step critical path (perf review): one batched
    # XLA op over all B; only the broadcast scale stays in-kernel.
    y = jnp.max(template, axis=(2, 3))                         # (B, C)
    h = jnp.maximum(y @ params["w1"] + params["b1"], 0.0)      # (B, 9)
    att = jax.nn.sigmoid(h @ params["w2"] + params["b2"])      # (B, C)
    att = att[:, None, :].astype(jnp.float32)                  # (B, 1, C)

    # Channels-last template: C on lanes (attention scale + matmul LHS).
    z_cl = jnp.transpose(template, (0, 2, 3, 1)).reshape(B, S, C)
    # Channels-first search, spatial flattened onto lanes (matmul RHS).
    # No padding; bf16 halves the dominant per-step DMA bytes.
    x_cf = search.reshape(B, C, HW).astype(compute_dtype)

    Bb = block_b if block_b is not None else _pick_block_b(B)
    assert B % Bb == 0
    G = B // Bb

    kernel = _make_kernel(Bb, Hz, Wz, Hx, Wx, compute_dtype)
    out = pl.pallas_call(
        kernel,
        out_shape=jax.ShapeDtypeStruct((G, Bb, HW), jnp.float32),
        grid=(G,),
        in_specs=[
            pl.BlockSpec((Bb, S, C), lambda g: (g, 0, 0)),
            pl.BlockSpec((Bb, 1, C), lambda g: (g, 0, 0)),
            pl.BlockSpec((Bb, C, HW), lambda g: (g, 0, 0)),
        ],
        out_specs=pl.BlockSpec((1, Bb, HW), lambda g: (g, 0, 0)),
        compiler_params=pltpu.CompilerParams(
            dimension_semantics=("parallel",)),
    )(z_cl, att, x_cf)

    # Crop the lane-dense (Hx*Wx) score rows to the valid (Ho, Wo) window.
    score = out.reshape(B, Hx, Wx)[:, :Ho, :Wo]
    return score[:, None, :, :]


# ---------------------------------------------------------------------------
# Pure-JAX reference for correctness checking (f32 throughout).
# ---------------------------------------------------------------------------
def siamfc_forward_ref(template, search, params):
    y = jnp.max(template, axis=(2, 3))                            # (B, C)
    h = jnp.maximum(y @ params["w1"] + params["b1"], 0.0)         # (B, 9)
    a = jax.nn.sigmoid(h @ params["w2"] + params["b2"])           # (B, C)
    zf_s = template * a[:, :, None, None]
    B = template.shape[0]
    scores = [
        lax.conv_general_dilated(
            search[b:b + 1], zf_s[b:b + 1], (1, 1), "VALID",
            dimension_numbers=("NCHW", "OIHW", "NCHW"))[0]
        for b in range(B)
    ]
    return jnp.stack(scores, axis=0)


if __name__ == "__main__":
    # Small synthetic shapes (module defaults use channel=512; scaled to 32).
    B, C = 4, 32
    Hz = Wz = 8       # template feature spatial
    Hx = Wx = 16      # search feature spatial

    key = jax.random.PRNGKey(0)
    k_t, k_s, k_w1, k_b1, k_w2, k_b2 = jax.random.split(key, 6)

    template = jax.random.normal(k_t, (B, C, Hz, Wz), jnp.float32)
    search = jax.random.normal(k_s, (B, C, Hx, Wx), jnp.float32)

    # Channel_attention_net fc params (pre-transposed to the y @ W convention;
    # equivalent to PyTorch Linear weights of shape (out, in) transposed).
    params = {
        "w1": jax.random.normal(k_w1, (C, 9), jnp.float32) * 0.1,
        "b1": jax.random.normal(k_b1, (1, 9), jnp.float32) * 0.1,
        "w2": jax.random.normal(k_w2, (9, C), jnp.float32) * 0.1,
        "b2": jax.random.normal(k_b2, (1, C), jnp.float32) * 0.1,
    }

    fwd = jax.jit(siamfc_forward)
    score = jax.block_until_ready(fwd(template, search, params))
    ref = jax.block_until_ready(siamfc_forward_ref(template, search, params))

    assert score.shape == (B, 1, Hx - Hz + 1, Wx - Wz + 1), score.shape
    err = float(jnp.max(jnp.abs(score - ref)))
    scale = float(jnp.max(jnp.abs(ref)))
    # Tolerance sized for bf16 MXU operands (~2^-8 relative per product).
    assert err <= 3e-2 * scale + 1e-3, (err, scale)

    print("KERNEL_OK")
</pallas_src>

<mosaic_0001>
module attributes {stable_mosaic.version = 11 : i64} {
  func.func @kernel(%arg0: i32, %arg1: memref<2x64x32xf32, #tpu.memory_space<vmem>>, %arg2: memref<2x1x32xf32, #tpu.memory_space<vmem>>, %arg3: memref<2x32x256xbf16, #tpu.memory_space<vmem>>, %arg4: memref<1x2x256xf32, #tpu.memory_space<vmem>>) attributes {dimension_semantics = [#tpu.dimension_semantics<parallel>], iteration_bounds = array<i64: 2>, scalar_prefetch = 0 : i64, scratch_operands = 0 : i64, tpu.core_type = #tpu.core_type<tc>, window_params = [{transform_indices = @transform_0, window_bounds = array<i64: 2, 64, 32>}, {transform_indices = @transform_1, window_bounds = array<i64: 2, 1, 32>}, {transform_indices = @transform_2, window_bounds = array<i64: 2, 32, 256>}, {transform_indices = @transform_3, window_bounds = array<i64: 1, 2, 256>}]} {
    %c0 = arith.constant 0 : index
    %c0_0 = arith.constant 0 : index
    %c0_1 = arith.constant 0 : index
    %0 = vector.load %arg1[%c0, %c0_0, %c0_1] : memref<2x64x32xf32, #tpu.memory_space<vmem>>, vector<1x64x32xf32>
    %1 = vector.shape_cast %0 : vector<1x64x32xf32> to vector<64x32xf32>
    %c0_2 = arith.constant 0 : index
    %c0_3 = arith.constant 0 : index
    %c0_4 = arith.constant 0 : index
    %2 = vector.load %arg2[%c0_2, %c0_3, %c0_4] : memref<2x1x32xf32, #tpu.memory_space<vmem>>, vector<1x1x32xf32>
    %3 = vector.shape_cast %2 : vector<1x1x32xf32> to vector<1x32xf32>
    %4 = vector.broadcast %3 : vector<1x32xf32> to vector<64x32xf32>
    %5 = arith.mulf %1, %4 : vector<64x32xf32>
    %6 = arith.truncf %5 : vector<64x32xf32> to vector<64x32xbf16>
    %c0_5 = arith.constant 0 : index
    %c0_6 = arith.constant 0 : index
    %c0_7 = arith.constant 0 : index
    %7 = vector.load %arg3[%c0_5, %c0_6, %c0_7] : memref<2x32x256xbf16, #tpu.memory_space<vmem>>, vector<1x32x256xbf16>
    %8 = vector.shape_cast %7 : vector<1x32x256xbf16> to vector<32x256xbf16>
    %cst = arith.constant dense<0.000000e+00> : vector<64x256xf32>
    %9 = tpu.matmul %6, %8, %cst {dimension_numbers = #tpu.dot_dimension_numbers<[1], [0], [0], [1], [0, 0, 1, 1], [], []>} : vector<64x32xbf16>, vector<32x256xbf16>, vector<64x256xf32> -> vector<64x256xf32>
    %10 = vector.extract_strided_slice %9 {offsets = [32, 0], sizes = [32, 256], strides = [1, 1]} : vector<64x256xf32> to vector<32x256xf32>
    %c192_i32 = arith.constant 192 : i32
    %11 = tpu.dynamic_rotate %10 by %c192_i32 dim 1 : vector<32x256xf32>, i32 -> vector<32x256xf32>
    %12 = vector.extract_strided_slice %9 {offsets = [0, 0], sizes = [32, 256], strides = [1, 1]} : vector<64x256xf32> to vector<32x256xf32>
    %13 = arith.addf %12, %11 : vector<32x256xf32>
    %14 = vector.extract_strided_slice %13 {offsets = [16, 0], sizes = [16, 256], strides = [1, 1]} : vector<32x256xf32> to vector<16x256xf32>
    %c224_i32 = arith.constant 224 : i32
    %15 = tpu.dynamic_rotate %14 by %c224_i32 dim 1 : vector<16x256xf32>, i32 -> vector<16x256xf32>
    %16 = vector.extract_strided_slice %13 {offsets = [0, 0], sizes = [16, 256], strides = [1, 1]} : vector<32x256xf32> to vector<16x256xf32>
    %17 = arith.addf %16, %15 : vector<16x256xf32>
    %18 = vector.extract_strided_slice %17 {offsets = [8, 0], sizes = [8, 256], strides = [1, 1]} : vector<16x256xf32> to vector<8x256xf32>
    %c240_i32 = arith.constant 240 : i32
    %19 = tpu.dynamic_rotate %18 by %c240_i32 dim 1 : vector<8x256xf32>, i32 -> vector<8x256xf32>
    %20 = vector.extract_strided_slice %17 {offsets = [0, 0], sizes = [8, 256], strides = [1, 1]} : vector<16x256xf32> to vector<8x256xf32>
    %21 = arith.addf %20, %19 : vector<8x256xf32>
    %22 = vector.extract_strided_slice %21 {offsets = [4, 0], sizes = [4, 256], strides = [1, 1]} : vector<8x256xf32> to vector<4x256xf32>
    %c252_i32 = arith.constant 252 : i32
    %23 = tpu.dynamic_rotate %22 by %c252_i32 dim 1 : vector<4x256xf32>, i32 -> vector<4x256xf32>
    %24 = vector.extract_strided_slice %21 {offsets = [0, 0], sizes = [4, 256], strides = [1, 1]} : vector<8x256xf32> to vector<4x256xf32>
    %25 = arith.addf %24, %23 : vector<4x256xf32>
    %26 = vector.extract_strided_slice %25 {offsets = [2, 0], sizes = [2, 256], strides = [1, 1]} : vector<4x256xf32> to vector<2x256xf32>
    %c254_i32 = arith.constant 254 : i32
    %27 = tpu.dynamic_rotate %26 by %c254_i32 dim 1 : vector<2x256xf32>, i32 -> vector<2x256xf32>
    %28 = vector.extract_strided_slice %25 {offsets = [0, 0], sizes = [2, 256], strides = [1, 1]} : vector<4x256xf32> to vector<2x256xf32>
    %29 = arith.addf %28, %27 : vector<2x256xf32>
    %30 = vector.extract_strided_slice %29 {offsets = [1, 0], sizes = [1, 256], strides = [1, 1]} : vector<2x256xf32> to vector<1x256xf32>
    %c255_i32 = arith.constant 255 : i32
    %31 = tpu.dynamic_rotate %30 by %c255_i32 dim 1 : vector<1x256xf32>, i32 -> vector<1x256xf32>
    %32 = vector.extract_strided_slice %29 {offsets = [0, 0], sizes = [1, 256], strides = [1, 1]} : vector<2x256xf32> to vector<1x256xf32>
    %33 = arith.addf %32, %31 : vector<1x256xf32>
    %c0_8 = arith.constant 0 : index
    %c0_9 = arith.constant 0 : index
    %c0_10 = arith.constant 0 : index
    %34 = vector.load %arg4[%c0_8, %c0_9, %c0_10] : memref<1x2x256xf32, #tpu.memory_space<vmem>>, vector<1x1x256xf32>
    %35 = vector.shape_cast %34 : vector<1x1x256xf32> to vector<1x256xf32>
    %36 = vector.shape_cast %33 : vector<1x256xf32> to vector<1x1x256xf32>
    tpu.vector_store %arg4[%c0_8, %c0_9, %c0_10], %36 {strides = array<i32>} : memref<1x2x256xf32, #tpu.memory_space<vmem>>, vector<1x1x256xf32>,
    %c1 = arith.constant 1 : index
    %c0_11 = arith.constant 0 : index
    %c0_12 = arith.constant 0 : index
    %37 = vector.load %arg1[%c1, %c0_11, %c0_12] : memref<2x64x32xf32, #tpu.memory_space<vmem>>, vector<1x64x32xf32>
    %38 = vector.shape_cast %37 : vector<1x64x32xf32> to vector<64x32xf32>
    %c1_13 = arith.constant 1 : index
    %c0_14 = arith.constant 0 : index
    %c0_15 = arith.constant 0 : index
    %39 = vector.load %arg2[%c1_13, %c0_14, %c0_15] : memref<2x1x32xf32, #tpu.memory_space<vmem>>, vector<1x1x32xf32>
    %40 = vector.shape_cast %39 : vector<1x1x32xf32> to vector<1x32xf32>
    %41 = vector.broadcast %40 : vector<1x32xf32> to vector<64x32xf32>
    %42 = arith.mulf %38, %41 : vector<64x32xf32>
    %43 = arith.truncf %42 : vector<64x32xf32> to vector<64x32xbf16>
    %c1_16 = arith.constant 1 : index
    %c0_17 = arith.constant 0 : index
    %c0_18 = arith.constant 0 : index
    %44 = vector.load %arg3[%c1_16, %c0_17, %c0_18] : memref<2x32x256xbf16, #tpu.memory_space<vmem>>, vector<1x32x256xbf16>
    %45 = vector.shape_cast %44 : vector<1x32x256xbf16> to vector<32x256xbf16>
    %cst_19 = arith.constant dense<0.000000e+00> : vector<64x256xf32>
    %46 = tpu.matmul %43, %45, %cst_19 {dimension_numbers = #tpu.dot_dimension_numbers<[1], [0], [0], [1], [0, 0, 1, 1], [], []>} : vector<64x32xbf16>, vector<32x256xbf16>, vector<64x256xf32> -> vector<64x256xf32>
    %47 = vector.extract_strided_slice %46 {offsets = [32, 0], sizes = [32, 256], strides = [1, 1]} : vector<64x256xf32> to vector<32x256xf32>
    %c192_i32_20 = arith.constant 192 : i32
    %48 = tpu.dynamic_rotate %47 by %c192_i32_20 dim 1 : vector<32x256xf32>, i32 -> vector<32x256xf32>
    %49 = vector.extract_strided_slice %46 {offsets = [0, 0], sizes = [32, 256], strides = [1, 1]} : vector<64x256xf32> to vector<32x256xf32>
    %50 = arith.addf %49, %48 : vector<32x256xf32>
    %51 = vector.extract_strided_slice %50 {offsets = [16, 0], sizes = [16, 256], strides = [1, 1]} : vector<32x256xf32> to vector<16x256xf32>
    %c224_i32_21 = arith.constant 224 : i32
    %52 = tpu.dynamic_rotate %51 by %c224_i32_21 dim 1 : vector<16x256xf32>, i32 -> vector<16x256xf32>
    %53 = vector.extract_strided_slice %50 {offsets = [0, 0], sizes = [16, 256], strides = [1, 1]} : vector<32x256xf32> to vector<16x256xf32>
    %54 = arith.addf %53, %52 : vector<16x256xf32>
    %55 = vector.extract_strided_slice %54 {offsets = [8, 0], sizes = [8, 256], strides = [1, 1]} : vector<16x256xf32> to vector<8x256xf32>
    %c240_i32_22 = arith.constant 240 : i32
    %56 = tpu.dynamic_rotate %55 by %c240_i32_22 dim 1 : vector<8x256xf32>, i32 -> vector<8x256xf32>
    %57 = vector.extract_strided_slice %54 {offsets = [0, 0], sizes = [8, 256], strides = [1, 1]} : vector<16x256xf32> to vector<8x256xf32>
    %58 = arith.addf %57, %56 : vector<8x256xf32>
    %59 = vector.extract_strided_slice %58 {offsets = [4, 0], sizes = [4, 256], strides = [1, 1]} : vector<8x256xf32> to vector<4x256xf32>
    %c252_i32_23 = arith.constant 252 : i32
    %60 = tpu.dynamic_rotate %59 by %c252_i32_23 dim 1 : vector<4x256xf32>, i32 -> vector<4x256xf32>
    %61 = vector.extract_strided_slice %58 {offsets = [0, 0], sizes = [4, 256], strides = [1, 1]} : vector<8x256xf32> to vector<4x256xf32>
    %62 = arith.addf %61, %60 : vector<4x256xf32>
    %63 = vector.extract_strided_slice %62 {offsets = [2, 0], sizes = [2, 256], strides = [1, 1]} : vector<4x256xf32> to vector<2x256xf32>
    %c254_i32_24 = arith.constant 254 : i32
    %64 = tpu.dynamic_rotate %63 by %c254_i32_24 dim 1 : vector<2x256xf32>, i32 -> vector<2x256xf32>
    %65 = vector.extract_strided_slice %62 {offsets = [0, 0], sizes = [2, 256], strides = [1, 1]} : vector<4x256xf32> to vector<2x256xf32>
    %66 = arith.addf %65, %64 : vector<2x256xf32>
    %67 = vector.extract_strided_slice %66 {offsets = [1, 0], sizes = [1, 256], strides = [1, 1]} : vector<2x256xf32> to vector<1x256xf32>
    %c255_i32_25 = arith.constant 255 : i32
    %68 = tpu.dynamic_rotate %67 by %c255_i32_25 dim 1 : vector<1x256xf32>, i32 -> vector<1x256xf32>
    %69 = vector.extract_strided_slice %66 {offsets = [0, 0], sizes = [1, 256], strides = [1, 1]} : vector<2x256xf32> to vector<1x256xf32>
    %70 = arith.addf %69, %68 : vector<1x256xf32>
    %c0_26 = arith.constant 0 : index
    %c1_27 = arith.constant 1 : index
    %c0_28 = arith.constant 0 : index
    %71 = vector.load %arg4[%c0_26, %c1_27, %c0_28] : memref<1x2x256xf32, #tpu.memory_space<vmem>>, vector<1x1x256xf32>
    %72 = vector.shape_cast %71 : vector<1x1x256xf32> to vector<1x256xf32>
    %73 = vector.shape_cast %70 : vector<1x256xf32> to vector<1x1x256xf32>
    tpu.vector_store %arg4[%c0_26, %c1_27, %c0_28], %73 {strides = array<i32>} : memref<1x2x256xf32, #tpu.memory_space<vmem>>, vector<1x1x256xf32>,
    return
  }
  func.func @transform_0(%arg0: i32) -> (i32, i32, i32) {
    %c0_i32 = arith.constant 0 : i32
    %c0_i32_0 = arith.constant 0 : i32
    %c0_i32_1 = arith.constant 0 : i32
    return %arg0, %c0_i32, %c0_i32_0 : i32, i32, i32
  }
  func.func @transform_1(%arg0: i32) -> (i32, i32, i32) {
    %c0_i32 = arith.constant 0 : i32
    %c0_i32_0 = arith.constant 0 : i32
    %c0_i32_1 = arith.constant 0 : i32
    return %arg0, %c0_i32, %c0_i32_0 : i32, i32, i32
  }
  func.func @transform_2(%arg0: i32) -> (i32, i32, i32) {
    %c0_i32 = arith.constant 0 : i32
    %c0_i32_0 = arith.constant 0 : i32
    %c0_i32_1 = arith.constant 0 : i32
    return %arg0, %c0_i32, %c0_i32_0 : i32, i32, i32
  }
  func.func @transform_3(%arg0: i32) -> (i32, i32, i32) {
    %c0_i32 = arith.constant 0 : i32
    %c0_i32_0 = arith.constant 0 : i32
    %c0_i32_1 = arith.constant 0 : i32
    return %arg0, %c0_i32, %c0_i32_0 : i32, i32, i32
  }
}

</mosaic_0001>

<llo_original>
// kernel: siamfc_forward.1
$region0: #{siamfc_forward.1}
  #allocation0 [shape = 'u32[]', space=smem, size = 0x4, offset = 0x4, fixed_abs, tag = 'smem constant byte address 0x4 - core index']
  #allocation1 [shape = 'u32[144,128]{1,0:T(1,128)}', space=vmem, size = 0x12000, scoped, tag = 'internal scratch']
  %s0 = inlined_call_operand.vmem [shape: f32[4,64,32], index: 0, kind: input, shape index: {}]
  %s1 = inlined_call_operand.vmem [shape: f32[4,1,32], index: 1, kind: input, shape index: {}]
  %s2 = inlined_call_operand.vmem [shape: bf16[4,32,256], index: 2, kind: input, shape index: {}]
  %s3 = inlined_call_operand.vmem [shape: f32[2,2,256], index: 3, kind: output, shape index: {}]
  %s4 = sld [smem:[#allocation0]]
  $region45: #{siamfc_forward.1} parent=0
    _
  %s6 = ssub.s32 1, %s4
  %s7 = scalar_select 0, %s6, %s4
  loop: start=0, step=1, limit=4
  $region2: #{siamfc_forward.1} parent=0 // loop_pre_header
    _
  $region3: #{siamfc_forward.1} parent=0 // loop_header
    %s9 = sphi 0, %s13
    %p10 = scmp.ge.s32.totalorder %s9, 4
    %s19 = sphi 0, %s21
    %s22 = sphi 0, %s19
    %s23 = sphi 0, %s22
    %s39 = sphi 0, %s23
    %s45 = sphi 0, %s47
    %s48 = sphi 0, %s45
    %s49 = sphi 0, %s48
    %s65 = sphi 0, %s49
    %s71 = sphi 0, %s73
    %s74 = sphi 0, %s71
    %s75 = sphi 0, %s74
    %s91 = sphi 0, %s75
    %s97 = sphi 0, %s99
    %s100 = sphi 0, %s97
    %s101 = sphi 0, %s100
    %s117 = sphi 0, %s101
  $region4: #{siamfc_forward.1} parent=0 // loop_header_branch
    %12 = sbr.rel (%p10) target = $region8
  $region5: #{siamfc_forward.1} parent=0 // loop_body
    %s14 = ssub.s32 %s9, 1
    %s15 = ssub.s32 %s9, 2
    %s16 = sadd.s32 %s9, 1
    %s17 = ssub.s32 %s9, %s16
    %p18 = scmp.eq.s32.totalorder %s17, 0
    %s20 = sadd.s32 %s19, 1
    %s21 = scalar_select %p18, %s19, %s20
    %p24 = pneg %p18
    %p25 = scmp.eq.s32.totalorder %s9, 1
    %p26 = por %p24, %p25
    %p27 = scmp.ne.s32.totalorder %s19, %s22
    %p28 = scmp.eq.s32.totalorder %s9, 0
    %p29 = por %p27, %p28
    %p30 = scmp.ne.s32.totalorder %s19, %s22
    %p31 = scmp.eq.s32.totalorder %s14, 1
    %p32 = por %p30, %p31
    %p33 = scmp.ne.s32.totalorder %s22, %s23
    %p34 = scmp.eq.s32.totalorder %s14, 0
    %p35 = por %p33, %p34
    %p36 = scmp.ne.s32.totalorder %s22, %s23
    %p37 = scmp.eq.s32.totalorder %s15, 1
    %p38 = por %p36, %p37
    %p40 = scmp.ne.s32.totalorder %s23, %s39
    %p41 = scmp.eq.s32.totalorder %s15, 0
    %p42 = por %p40, %p41
    %s43 = ssub.s32 %s9, %s16
    %p44 = scmp.eq.s32.totalorder %s43, 0
    %s46 = sadd.s32 %s45, 1
    %s47 = scalar_select %p44, %s45, %s46
    %p50 = pneg %p44
    %p51 = scmp.eq.s32.totalorder %s9, 1
    %p52 = por %p50, %p51
    %p53 = scmp.ne.s32.totalorder %s45, %s48
    %p54 = scmp.eq.s32.totalorder %s9, 0
    %p55 = por %p53, %p54
    %p56 = scmp.ne.s32.totalorder %s45, %s48
    %p57 = scmp.eq.s32.totalorder %s14, 1
    %p58 = por %p56, %p57
    %p59 = scmp.ne.s32.totalorder %s48, %s49
    %p60 = scmp.eq.s32.totalorder %s14, 0
    %p61 = por %p59, %p60
    %p62 = scmp.ne.s32.totalorder %s48, %s49
    %p63 = scmp.eq.s32.totalorder %s15, 1
    %p64 = por %p62, %p63
    %p66 = scmp.ne.s32.totalorder %s49, %s65
    %p67 = scmp.eq.s32.totalorder %s15, 0
    %p68 = por %p66, %p67
    %s69 = ssub.s32 %s9, %s16
    %p70 = scmp.eq.s32.totalorder %s69, 0
    %s72 = sadd.s32 %s71, 1
    %s73 = scalar_select %p70, %s71, %s72
    %p76 = pneg %p70
    %p77 = scmp.eq.s32.totalorder %s9, 1
    %p78 = por %p76, %p77
    %p79 = scmp.ne.s32.totalorder %s71, %s74
    %p80 = scmp.eq.s32.totalorder %s9, 0
    %p81 = por %p79, %p80
    %p82 = scmp.ne.s32.totalorder %s71, %s74
    %p83 = scmp.eq.s32.totalorder %s14, 1
    %p84 = por %p82, %p83
    %p85 = scmp.ne.s32.totalorder %s74, %s75
    %p86 = scmp.eq.s32.totalorder %s14, 0
    %p87 = por %p85, %p86
    %p88 = scmp.ne.s32.totalorder %s74, %s75
    %p89 = scmp.eq.s32.totalorder %s15, 1
    %p90 = por %p88, %p89
    %p92 = scmp.ne.s32.totalorder %s75, %s91
    %p93 = scmp.eq.s32.totalorder %s15, 0
    %p94 = por %p92, %p93
    %s95 = ssub.s32 %s9, %s16
    %p96 = scmp.eq.s32.totalorder %s95, 0
    %s98 = sadd.s32 %s97, 1
    %s99 = scalar_select %p96, %s97, %s98
    %p102 = pneg %p96
    %p103 = scmp.eq.s32.totalorder %s9, 1
    %p104 = por %p102, %p103
    %p105 = scmp.ne.s32.totalorder %s97, %s100
    %p106 = scmp.eq.s32.totalorder %s9, 0
    %p107 = por %p105, %p106
    %p108 = scmp.ne.s32.totalorder %s97, %s100
    %p109 = scmp.eq.s32.totalorder %s14, 1
    %p110 = por %p108, %p109
    %p111 = scmp.ne.s32.totalorder %s100, %s101
    %p112 = scmp.eq.s32.totalorder %s14, 0
    %p113 = por %p111, %p112
    %p114 = scmp.ne.s32.totalorder %s100, %s101
    %p115 = scmp.eq.s32.totalorder %s15, 1
    %p116 = por %p114, %p115
    %p118 = scmp.ne.s32.totalorder %s101, %s117
    %p119 = scmp.eq.s32.totalorder %s15, 0
    %p120 = por %p118, %p119
    %p121 = scmp.le.s32.totalorder 1, %s9
    %p122 = scmp.lt.s32.totalorder %s9, 3
    %p123 = pnand %p121, %p122
    %p124 = pneg %p123
    // Predicated region
    $region9: #{siamfc_forward.1} parent=5 // pred_check
      _
    $region10: #{siamfc_forward.1} parent=5 // pred_check_branch
      %126 = sbr.rel (%p123) target = $region12
    $region11: #{siamfc_forward.1} parent=5 // pred_region
      %s127 = ssub.s32 %s9, 1
    $region12: #{siamfc_forward.1} parent=5 // pred_fallthru
      _
    %p128 = scmp.lt.s32.totalorder %s9, 2
    // Predicated region
    $region13: #{siamfc_forward.1} parent=5 // pred_check
      %p129 = pneg %p128
    $region14: #{siamfc_forward.1} parent=5 // pred_check_branch
      %131 = sbr.rel (%p129) target = $region16
    $region15: #{siamfc_forward.1} parent=5 // pred_region
      // Predicated region
      $region17: #{siamfc_forward.1} parent=15 // pred_check
        %p132 = pneg %p29
      $region18: #{siamfc_forward.1} parent=15 // pred_check_branch
        %134 = sbr.rel (%p132) target = $region20
      $region19: #{siamfc_forward.1} parent=15 // pred_region
        %s135 = smul.u32 2, %s9
        %p136 = scmp.lt.s32.totalorder %s135, 3
        %s137 = scalar_select %p136, %s135, 3
        %s138 = smul.addr %s137, 8
        %s139 = smul.addr %s138, 8
        %s140 = scalar_lea.vmem %s0, %s139
        %s141 = smul.u32 2, %s9
      $region20: #{siamfc_forward.1} parent=15 // pred_fallthru
        _
      // Predicated region
      $region21: #{siamfc_forward.1} parent=15 // pred_check
        %p142 = pneg %p55
      $region22: #{siamfc_forward.1} parent=15 // pred_check_branch
        %144 = sbr.rel (%p142) target = $region24
      $region23: #{siamfc_forward.1} parent=15 // pred_region
        %s145 = smul.u32 2, %s9
        %p146 = scmp.lt.s32.totalorder %s145, 3
        %s147 = scalar_select %p146, %s145, 3
        %s148 = scalar_lea.vmem %s1, %s147
        %s149 = smul.u32 2, %s9
      $region24: #{siamfc_forward.1} parent=15 // pred_fallthru
        _
      // Predicated region
      $region25: #{siamfc_forward.1} parent=15 // pred_check
        %p150 = pneg %p81
      $region26: #{siamfc_forward.1} parent=15 // pred_check_branch
        %152 = sbr.rel (%p150) target = $region28
      $region27: #{siamfc_forward.1} parent=15 // pred_region
        %s153 = smul.u32 2, %s9
        %p154 = scmp.lt.s32.totalorder %s153, 3
        %s155 = scalar_select %p154, %s153, 3
        %s156 = smul.addr %s155, 8
        %s157 = smul.addr %s156, 4
        %s158 = scalar_lea.vmem %s2, %s157
        %s159 = smul.u32 2, %s9
      $region28: #{siamfc_forward.1} parent=15 // pred_fallthru
        _
    $region16: #{siamfc_forward.1} parent=5 // pred_fallthru
      _
    %p160 = scmp.le.s32.totalorder 1, %s9
    %p161 = scmp.lt.s32.totalorder %s9, 3
    %p162 = pnand %p160, %p161
    %p163 = pneg %p162
    // Predicated region
    $region29: #{siamfc_forward.1} parent=5 // pred_check
      _
    $region30: #{siamfc_forward.1} parent=5 // pred_check_branch
      %165 = sbr.rel (%p162) target = $region32
    $region31: #{siamfc_forward.1} parent=5 // pred_region
      %s166 = ssub.s32 %s9, 1
      %s167 = smul.u32 2, %s14
      %p168 = scmp.lt.s32.totalorder %s167, 3
      %s169 = scalar_select %p168, %s167, 3
      %s170 = smul.addr %s169, 8
      %s171 = smul.addr %s170, 8
      %s172 = scalar_lea.vmem %s0, %s171
      %p173 = pneg %p35
      %p174 = pneg %p32
      %s175 = smul.u32 2, %s14
      %p176 = scmp.lt.s32.totalorder %s175, 3
      %s177 = scalar_select %p176, %s175, 3
      %s178 = scalar_lea.vmem %s1, %s177
      %p179 = pneg %p61
      %p180 = pneg %p58
      %s181 = smul.u32 2, %s14
      %p182 = scmp.lt.s32.totalorder %s181, 3
      %s183 = scalar_select %p182, %s181, 3
      %s184 = smul.addr %s183, 8
      %s185 = smul.addr %s184, 4
      %s186 = scalar_lea.vmem %s2, %s185
      %p187 = pneg %p87
      %p188 = pneg %p84
      %p189 = pneg %p113
      %p190 = pneg %p110
      %p191 = scmp.lt.s32.totalorder %s14, 1
      %s192 = scalar_select %p191, %s14, 1
      %s193 = smul.addr %s192, 2
      %s194 = smul.addr %s193, 2
      %s195 = scalar_lea.vmem %s3, %s194
      %s196 = smul.u32 2, %s14
      %p197 = scmp.lt.s32.totalorder %s196, 3
      %s198 = scalar_select %p197, %s196, 3
      %s199 = smul.addr %s198, 8
      %s200 = smul.addr %s199, 8
      %s201 = scalar_lea.vmem %s0, %s200
      %s202 = smul.u32 2, %s14
      %s203 = smul.u32 2, %s14
      %p204 = scmp.lt.s32.totalorder %s203, 3
      %s205 = scalar_select %p204, %s203, 3
      %s206 = scalar_lea.vmem %s1, %s205
      %s207 = smul.u32 2, %s14
      %s208 = smul.u32 2, %s14
      %p209 = scmp.lt.s32.totalorder %s208, 3
      %s210 = scalar_select %p209, %s208, 3
      %s211 = smul.addr %s210, 8
      %s212 = smul.addr %s211, 4
      %s213 = scalar_lea.vmem %s2, %s212
      %s214 = smul.u32 2, %s14
      %p215 = scmp.lt.s32.totalorder %s14, 1
      %s216 = scalar_select %p215, %s14, 1
      %s217 = smul.addr %s216, 2
      %s218 = smul.addr %s217, 2
      %s219 = scalar_lea.vmem %s3, %s218
      %v221 = vld [vmem:[%s201] sm:$0xff]
      %v222 = vld [vmem:[%s201 + $0x8] sm:$0xff]
      %v223 = vld [vmem:[%s201 + $0x10] sm:$0xff]
      %v224 = vld [vmem:[%s201 + $0x18] sm:$0xff]
      %v225 = vld [vmem:[%s201 + $0x20] sm:$0xff]
      %v226 = vld [vmem:[%s201 + $0x28] sm:$0xff]
      %v227 = vld [vmem:[%s201 + $0x30] sm:$0xff]
      %v228 = vld [vmem:[%s201 + $0x38] sm:$0xff]
      %v229 = vld [vmem:[%s206] sm:$0x1]
      %v231 = vlaneseq
      %v232 = vshrl.u32 %v231, 7
      %v233 = vsub.s32 0, %v232
      %v234 = vrot.slane %v229, %v233
      %v236 = vmul.f32 %v221, %v234
      %v237 = vmul.f32 %v222, %v234
      %v238 = vmul.f32 %v223, %v234
      %v239 = vmul.f32 %v224, %v234
      %v240 = vmul.f32 %v225, %v234
      %v241 = vmul.f32 %v226, %v234
      %v242 = vmul.f32 %v227, %v234
      %v243 = vmul.f32 %v228, %v234
      %v244 = vpack.c.bf16 %v237, %v236
      %v245 = vpack.c.bf16 %v239, %v238
      %v246 = vpack.c.bf16 %v241, %v240
      %v247 = vpack.c.bf16 %v243, %v242
      %v248 = vld [vmem:[%s213] sm:$0xff]
      %v249 = vld [vmem:[%s213 + $0x8] sm:$0xff]
      %v250 = vld [vmem:[%s213 + $0x10] sm:$0xff]
      %v251 = vld [vmem:[%s213 + $0x18] sm:$0xff]
      %v256 = vunpack.c.l.b16 %v248
      %v257 = vunpack.c.h.b16 %v248
      %v258 = vunpack.c.l.b16 %v249
      %v259 = vunpack.c.h.b16 %v249
      %v260 = vunpack.c.l.b16 %v250
      %v261 = vunpack.c.h.b16 %v250
      %v262 = vunpack.c.l.b16 %v251
      %v263 = vunpack.c.h.b16 %v251
      %v264 = vpack.c.b16 %v258, %v256
      %v265 = vpack.c.b16 %v259, %v257
      %v266 = vpack.c.b16 %v262, %v260
      %v267 = vpack.c.b16 %v263, %v261
      %vm272 = vcmask 261120
      %v274 = vsel %vm272, %v244, 0
      %v277 = vsel %vm272, %v245, 0
      %v280 = vsel %vm272, %v246, 0
      %v283 = vsel %vm272, %v247, 0
      %285 = vmatprep.subr.bf16.mxu0 0
      %286 = vmatpush1.bf16.msra.mxu0 0
      %287 = vmatprep.subr.bf16.mxu0 0
      %288 = vmatpush1.bf16.msra.mxu0 0
      %289 = vmatprep.subr.bf16.mxu0 0
      %290 = vmatpush1.bf16.msra.mxu0 0
      %291 = vmatprep.subr.bf16.mxu0 0
      %292 = vmatpush1.bf16.msra.mxu0 0
      %293 = vmatprep.subr.bf16.mxu0 0
      %294 = vmatpush1.bf16.msra.mxu0 0
      %295 = vmatprep.subr.bf16.mxu0 0
      %296 = vmatpush1.bf16.msra.mxu0 0
      %297 = vmatprep.subr.bf16.mxu0 %v267
      %298 = vmatpush1.bf16.msra.mxu0 %v266
      %299 = vmatprep.subr.bf16.mxu0 %v265
      %300 = vmatpush1.bf16.msra.mxu0 %v264
      %301 = vmatprep.subr.bf16.mxu0 0
      %302 = vmatpush2.bf16.msra.mxu0 0
      %303 = vmatprep.subr.bf16.mxu0 0
      %304 = vmatpush2.bf16.msra.mxu0 0
      %305 = vmatprep.subr.bf16.mxu0 0
      %306 = vmatpush2.bf16.msra.mxu0 0
      %307 = vmatprep.subr.bf16.mxu0 0
      %308 = vmatpush2.bf16.msra.mxu0 0
      %309 = vmatprep.subr.bf16.mxu0 0
      %310 = vmatpush2.bf16.msra.mxu0 0
      %311 = vmatprep.subr.bf16.mxu0 0
      %312 = vmatpush2.bf16.msra.mxu0 0
      %313 = vmatprep.subr.bf16.mxu0 0
      %314 = vmatpush2.bf16.msra.mxu0 0
      %315 = vmatprep.subr.bf16.mxu0 0
      %316 = vmatpush2.bf16.msra.mxu0 0
      %317 = vmatprep.mubr.bf16.mxu0 0
      %318 = vmatmul.mubr.bf16.gmra.mxu0 %v274
      %v319 = vpop.f32.mrf.mxu0
      %v320 = vadd.f32 0.0, %v319
      %v321 = vpop.f32.mrf.mxu0
      %v322 = vadd.f32 0.0, %v321
      %v323 = vpop.f32.mrf.mxu0
      %v324 = vadd.f32 0.0, %v323
      %v325 = vpop.f32.mrf.mxu0
      %v326 = vadd.f32 0.0, %v325
      %327 = vmatprep.mubr.bf16.mxu0 0
      %328 = vmatmul.mubr.bf16.gmra.mxu0 %v277
      %v329 = vpop.f32.mrf.mxu0
      %v330 = vadd.f32 0.0, %v329
      %v331 = vpop.f32.mrf.mxu0
      %v332 = vadd.f32 0.0, %v331
      %v333 = vpop.f32.mrf.mxu0
      %v334 = vadd.f32 0.0, %v333
      %v335 = vpop.f32.mrf.mxu0
      %v336 = vadd.f32 0.0, %v335
      %337 = vmatprep.mubr.bf16.mxu0 0
      %338 = vmatmul.mubr.bf16.gmra.mxu0 %v280
      %v339 = vpop.f32.mrf.mxu0
      %v340 = vadd.f32 0.0, %v339
      %v341 = vpop.f32.mrf.mxu0
      %v342 = vadd.f32 0.0, %v341
      %v343 = vpop.f32.mrf.mxu0
      %v344 = vadd.f32 0.0, %v343
      %v345 = vpop.f32.mrf.mxu0
      %v346 = vadd.f32 0.0, %v345
      %347 = vmatprep.mubr.bf16.mxu0 0
      %348 = vmatmul.mubr.bf16.gmra.mxu0 %v283
      %v349 = vpop.f32.mrf.mxu0
      %v350 = vadd.f32 0.0, %v349
      %v351 = vpop.f32.mrf.mxu0
      %v352 = vadd.f32 0.0, %v351
      %v353 = vpop.f32.mrf.mxu0
      %v354 = vadd.f32 0.0, %v353
      %v355 = vpop.f32.mrf.mxu0
      %v356 = vadd.f32 0.0, %v355
      %357 = vdwg.mxu0
      %358 = vrot.lane.b32.xlu0 %v340, 64
      %v359 = vpop.permute.xlu0 %358
      %360 = vrot.lane.b32.xlu0 %v344, 64
      %v361 = vpop.permute.xlu0 %360
      %362 = vrot.lane.b32.xlu0 %v350, 64
      %v363 = vpop.permute.xlu0 %362
      %364 = vrot.lane.b32.xlu0 %v354, 64
      %v365 = vpop.permute.xlu0 %364
      %366 = vrot.lane.b32.xlu0 %v342, 64
      %v367 = vpop.permute.xlu0 %366
      %368 = vrot.lane.b32.xlu0 %v346, 64
      %v369 = vpop.permute.xlu0 %368
      %370 = vrot.lane.b32.xlu0 %v352, 64
      %v371 = vpop.permute.xlu0 %370
      %372 = vrot.lane.b32.xlu0 %v356, 64
      %v373 = vpop.permute.xlu0 %372
      %v374 = vlaneseq
      %v375 = vand.u32 %v374, 127
      %vm376 = vcmp.lt.s32.totalorder %v375, 64
      %v377 = vsel %vm376, %v359, %v367
      %v378 = vsel %vm376, %v361, %v369
      %v379 = vsel %vm376, %v363, %v371
      %v380 = vsel %vm376, %v365, %v373
      %v381 = vsel %vm376, %v367, %v359
      %v382 = vsel %vm376, %v369, %v361
      %v383 = vsel %vm376, %v371, %v363
      %v384 = vsel %vm376, %v373, %v365
      %v385 = vadd.f32 %v320, %v377
      %v386 = vadd.f32 %v322, %v381
      %v387 = vadd.f32 %v324, %v378
      %v388 = vadd.f32 %v326, %v382
      %v389 = vadd.f32 %v330, %v379
      %v390 = vadd.f32 %v332, %v383
      %v391 = vadd.f32 %v334, %v380
      %v392 = vadd.f32 %v336, %v384
      %393 = vrot.lane.b32.xlu0 %v389, 96
      %v394 = vpop.permute.xlu0 %393
      %395 = vrot.lane.b32.xlu0 %v391, 96
      %v396 = vpop.permute.xlu0 %395
      %397 = vrot.lane.b32.xlu0 %v390, 96
      %v398 = vpop.permute.xlu0 %397
      %399 = vrot.lane.b32.xlu0 %v392, 96
      %v400 = vpop.permute.xlu0 %399
      %vm401 = vcmp.lt.s32.totalorder %v375, 96
      %v402 = vsel %vm401, %v394, %v398
      %v403 = vsel %vm401, %v396, %v400
      %v404 = vsel %vm401, %v398, %v394
      %v405 = vsel %vm401, %v400, %v396
      %v406 = vadd.f32 %v385, %v402
      %v407 = vadd.f32 %v386, %v404
      %v408 = vadd.f32 %v387, %v403
      %v409 = vadd.f32 %v388, %v405
      %410 = vrot.lane.b32.xlu0 %v408, 112
      %v411 = vpop.permute.xlu0 %410
      %412 = vrot.lane.b32.xlu0 %v409, 112
      %v413 = vpop.permute.xlu0 %412
      %vm414 = vcmp.lt.s32.totalorder %v375, 112
      %v415 = vsel %vm414, %v411, %v413
      %v416 = vsel %vm414, %v413, %v411
      %v417 = vadd.f32 %v406, %v415
      %v418 = vadd.f32 %v407, %v416
      %v421 = vrot.slane %v417, 4
      %v422 = vrot.slane %v418, 4
      %425 = vrot.lane.b32.xlu0 %v421, 124
      %v426 = vpop.permute.xlu0 %425
      %427 = vrot.lane.b32.xlu0 %v422, 124
      %v428 = vpop.permute.xlu0 %427
      %vm429 = vcmp.lt.s32.totalorder %v375, 124
      %v430 = vsel %vm429, %v426, %v428
      %v431 = vsel %vm429, %v428, %v426
      %v432 = vadd.f32 %v417, %v430
      %v433 = vadd.f32 %v418, %v431
      %v436 = vrot.slane %v432, 2
      %v437 = vrot.slane %v433, 2
      %440 = vrot.lane.b32.xlu0 %v436, 126
      %v441 = vpop.permute.xlu0 %440
      %442 = vrot.lane.b32.xlu0 %v437, 126
      %v443 = vpop.permute.xlu0 %442
      %vm444 = vcmp.lt.s32.totalorder %v375, 126
      %v445 = vsel %vm444, %v441, %v443
      %v446 = vsel %vm444, %v443, %v441
      %v447 = vadd.f32 %v432, %v445
      %v448 = vadd.f32 %v433, %v446
      %v451 = vrot.slane %v447, 1
      %v452 = vrot.slane %v448, 1
      %455 = vrot.lane.b32.xlu0 %v451, 127
      %v456 = vpop.permute.xlu0 %455
      %457 = vrot.lane.b32.xlu0 %v452, 127
      %v458 = vpop.permute.xlu0 %457
      %vm459 = vcmp.lt.s32.totalorder %v375, 127
      %v460 = vsel %vm459, %v456, %v458
      %v461 = vsel %vm459, %v458, %v456
      %v462 = vadd.f32 %v447, %v460
      %v463 = vadd.f32 %v448, %v461
      %v466 = vcombine.low %v462, %v463
      %v468 = vunpack.c.l.s4 1966171168
      %v469 = vunpack.c.0.s8 %v468
      %v470 = vlaneseq
      %v471 = vshrl.u32 %v470, 7
      %v472 = vsub.s32 %v469, %v471
      %v473 = vrot.slane %v466, %v472
      %v475 = vunpack.c.l.s4 1966171168
      %v476 = vunpack.c.0.s8 %v475
      %v477 = vlaneseq
      %v478 = vshrl.u32 %v477, 7
      %v479 = vsub.s32 %v476, %v478
      %v480 = vrot.slane %v473, %v479
      %v482 = vlaneseq
      %vm483 = vcmp.ge.s32.totalorder %v482, 0
      %vm484 = vcmp.lt.s32.totalorder %v482, 256
      %vm485 = vmand %vm483, %vm484
      %486 = vst.msk [vmem:[%s219] ss:$2 sm:$0x3] %vm485, %v480
      %s487 = scalar_lea.vmem %s201, 64
      %v488 = vld [vmem:[%s487] sm:$0xff]
      %v489 = vld [vmem:[%s487 + $0x8] sm:$0xff]
      %v490 = vld [vmem:[%s487 + $0x10] sm:$0xff]
      %v491 = vld [vmem:[%s487 + $0x18] sm:$0xff]
      %v492 = vld [vmem:[%s487 + $0x20] sm:$0xff]
      %v493 = vld [vmem:[%s487 + $0x28] sm:$0xff]
      %v494 = vld [vmem:[%s487 + $0x30] sm:$0xff]
      %v495 = vld [vmem:[%s487 + $0x38] sm:$0xff]
      %s496 = scalar_lea.vmem %s206, 1
      %v497 = vld [vmem:[%s496] sm:$0x1]
      %v499 = vlaneseq
      %v500 = vshrl.u32 %v499, 7
      %v501 = vsub.s32 0, %v500
      %v502 = vrot.slane %v497, %v501
      %v504 = vmul.f32 %v488, %v502
      %v505 = vmul.f32 %v489, %v502
      %v506 = vmul.f32 %v490, %v502
      %v507 = vmul.f32 %v491, %v502
      %v508 = vmul.f32 %v492, %v502
      %v509 = vmul.f32 %v493, %v502
      %v510 = vmul.f32 %v494, %v502
      %v511 = vmul.f32 %v495, %v502
      %v512 = vpack.c.bf16 %v505, %v504
      %v513 = vpack.c.bf16 %v507, %v506
      %v514 = vpack.c.bf16 %v509, %v508
      %v515 = vpack.c.bf16 %v511, %v510
      %s516 = scalar_lea.vmem %s213, 32
      %v517 = vld [vmem:[%s516] sm:$0xff]
      %v518 = vld [vmem:[%s516 + $0x8] sm:$0xff]
      %v519 = vld [vmem:[%s516 + $0x10] sm:$0xff]
      %v520 = vld [vmem:[%s516 + $0x18] sm:$0xff]
      %v525 = vunpack.c.l.b16 %v517
      %v526 = vunpack.c.h.b16 %v517
      %v527 = vunpack.c.l.b16 %v518
      %v528 = vunpack.c.h.b16 %v518
      %v529 = vunpack.c.l.b16 %v519
      %v530 = vunpack.c.h.b16 %v519
      %v531 = vunpack.c.l.b16 %v520
      %v532 = vunpack.c.h.b16 %v520
      %v533 = vpack.c.b16 %v527, %v525
      %v534 = vpack.c.b16 %v528, %v526
      %v535 = vpack.c.b16 %v531, %v529
      %v536 = vpack.c.b16 %v532, %v530
      %v542 = vsel %vm272, %v512, 0
      %v545 = vsel %vm272, %v513, 0
      %v548 = vsel %vm272, %v514, 0
      %v551 = vsel %vm272, %v515, 0
      %553 = vmatprep.subr.bf16.mxu0 0
      %554 = vmatpush1.bf16.msra.mxu0 0
      %555 = vmatprep.subr.bf16.mxu0 0
      %556 = vmatpush1.bf16.msra.mxu0 0
      %557 = vmatprep.subr.bf16.mxu0 0
      %558 = vmatpush1.bf16.msra.mxu0 0
      %559 = vmatprep.subr.bf16.mxu0 0
      %560 = vmatpush1.bf16.msra.mxu0 0
      %561 = vmatprep.subr.bf16.mxu0 0
      %562 = vmatpush1.bf16.msra.mxu0 0
      %563 = vmatprep.subr.bf16.mxu0 0
      %564 = vmatpush1.bf16.msra.mxu0 0
      %565 = vmatprep.subr.bf16.mxu0 %v536
      %566 = vmatpush1.bf16.msra.mxu0 %v535
      %567 = vmatprep.subr.bf16.mxu0 %v534
      %568 = vmatpush1.bf16.msra.mxu0 %v533
      %569 = vmatprep.subr.bf16.mxu0 0
      %570 = vmatpush2.bf16.msra.mxu0 0
      %571 = vmatprep.subr.bf16.mxu0 0
      %572 = vmatpush2.bf16.msra.mxu0 0
      %573 = vmatprep.subr.bf16.mxu0 0
      %574 = vmatpush2.bf16.msra.mxu0 0
      %575 = vmatprep.subr.bf16.mxu0 0
      %576 = vmatpush2.bf16.msra.mxu0 0
      %577 = vmatprep.subr.bf16.mxu0 0
      %578 = vmatpush2.bf16.msra.mxu0 0
      %579 = vmatprep.subr.bf16.mxu0 0
      %580 = vmatpush2.bf16.msra.mxu0 0
      %581 = vmatprep.subr.bf16.mxu0 0
      %582 = vmatpush2.bf16.msra.mxu0 0
      %583 = vmatprep.subr.bf16.mxu0 0
      %584 = vmatpush2.bf16.msra.mxu0 0
      %585 = vmatprep.mubr.bf16.mxu0 0
      %586 = vmatmul.mubr.bf16.gmra.mxu0 %v542
      %v587 = vpop.f32.mrf.mxu0
      %v588 = vadd.f32 0.0, %v587
      %v589 = vpop.f32.mrf.mxu0
      %v590 = vadd.f32 0.0, %v589
      %v591 = vpop.f32.mrf.mxu0
      %v592 = vadd.f32 0.0, %v591
      %v593 = vpop.f32.mrf.mxu0
      %v594 = vadd.f32 0.0, %v593
      %595 = vmatprep.mubr.bf16.mxu0 0
      %596 = vmatmul.mubr.bf16.gmra.mxu0 %v545
      %v597 = vpop.f32.mrf.mxu0
      %v598 = vadd.f32 0.0, %v597
      %v599 = vpop.f32.mrf.mxu0
      %v600 = vadd.f32 0.0, %v599
      %v601 = vpop.f32.mrf.mxu0
      %v602 = vadd.f32 0.0, %v601
      %v603 = vpop.f32.mrf.mxu0
      %v604 = vadd.f32 0.0, %v603
      %605 = vmatprep.mubr.bf16.mxu0 0
      %606 = vmatmul.mubr.bf16.gmra.mxu0 %v548
      %v607 = vpop.f32.mrf.mxu0
      %v608 = vadd.f32 0.0, %v607
      %v609 = vpop.f32.mrf.mxu0
      %v610 = vadd.f32 0.0, %v609
      %v611 = vpop.f32.mrf.mxu0
      %v612 = vadd.f32 0.0, %v611
      %v613 = vpop.f32.mrf.mxu0
      %v614 = vadd.f32 0.0, %v613
      %615 = vmatprep.mubr.bf16.mxu0 0
      %616 = vmatmul.mubr.bf16.gmra.mxu0 %v551
      %v617 = vpop.f32.mrf.mxu0
      %v618 = vadd.f32 0.0, %v617
      %v619 = vpop.f32.mrf.mxu0
      %v620 = vadd.f32 0.0, %v619
      %v621 = vpop.f32.mrf.mxu0
      %v622 = vadd.f32 0.0, %v621
      %v623 = vpop.f32.mrf.mxu0
      %v624 = vadd.f32 0.0, %v623
      %625 = vdwg.mxu0
      %626 = vrot.lane.b32.xlu0 %v608, 64
      %v627 = vpop.permute.xlu0 %626
      %628 = vrot.lane.b32.xlu0 %v612, 64
      %v629 = vpop.permute.xlu0 %628
      %630 = vrot.lane.b32.xlu0 %v618, 64
      %v631 = vpop.permute.xlu0 %630
      %632 = vrot.lane.b32.xlu0 %v622, 64
      %v633 = vpop.permute.xlu0 %632
      %634 = vrot.lane.b32.xlu0 %v610, 64
      %v635 = vpop.permute.xlu0 %634
      %636 = vrot.lane.b32.xlu0 %v614, 64
      %v637 = vpop.permute.xlu0 %636
      %638 = vrot.lane.b32.xlu0 %v620, 64
      %v639 = vpop.permute.xlu0 %638
      %640 = vrot.lane.b32.xlu0 %v624, 64
      %v641 = vpop.permute.xlu0 %640
      %v642 = vsel %vm376, %v627, %v635
      %v643 = vsel %vm376, %v629, %v637
      %v644 = vsel %vm376, %v631, %v639
      %v645 = vsel %vm376, %v633, %v641
      %v646 = vsel %vm376, %v635, %v627
      %v647 = vsel %vm376, %v637, %v629
      %v648 = vsel %vm376, %v639, %v631
      %v649 = vsel %vm376, %v641, %v633
      %v650 = vadd.f32 %v588, %v642
      %v651 = vadd.f32 %v590, %v646
      %v652 = vadd.f32 %v592, %v643
      %v653 = vadd.f32 %v594, %v647
      %v654 = vadd.f32 %v598, %v644
      %v655 = vadd.f32 %v600, %v648
      %v656 = vadd.f32 %v602, %v645
      %v657 = vadd.f32 %v604, %v649
      %658 = vrot.lane.b32.xlu0 %v654, 96
      %v659 = vpop.permute.xlu0 %658
      %660 = vrot.lane.b32.xlu0 %v656, 96
      %v661 = vpop.permute.xlu0 %660
      %662 = vrot.lane.b32.xlu0 %v655, 96
      %v663 = vpop.permute.xlu0 %662
      %664 = vrot.lane.b32.xlu0 %v657, 96
      %v665 = vpop.permute.xlu0 %664
      %v666 = vsel %vm401, %v659, %v663
      %v667 = vsel %vm401, %v661, %v665
      %v668 = vsel %vm401, %v663, %v659
      %v669 = vsel %vm401, %v665, %v661
      %v670 = vadd.f32 %v650, %v666
      %v671 = vadd.f32 %v651, %v668
      %v672 = vadd.f32 %v652, %v667
      %v673 = vadd.f32 %v653, %v669
      %674 = vrot.lane.b32.xlu0 %v672, 112
      %v675 = vpop.permute.xlu0 %674
      %676 = vrot.lane.b32.xlu0 %v673, 112
      %v677 = vpop.permute.xlu0 %676
      %v678 = vsel %vm414, %v675, %v677
      %v679 = vsel %vm414, %v677, %v675
      %v680 = vadd.f32 %v670, %v678
      %v681 = vadd.f32 %v671, %v679
      %v684 = vrot.slane %v680, 4
      %v685 = vrot.slane %v681, 4
      %688 = vrot.lane.b32.xlu0 %v684, 124
      %v689 = vpop.permute.xlu0 %688
      %690 = vrot.lane.b32.xlu0 %v685, 124
      %v691 = vpop.permute.xlu0 %690
      %v692 = vsel %vm429, %v689, %v691
      %v693 = vsel %vm429, %v691, %v689
      %v694 = vadd.f32 %v680, %v692
      %v695 = vadd.f32 %v681, %v693
      %v698 = vrot.slane %v694, 2
      %v699 = vrot.slane %v695, 2
      %702 = vrot.lane.b32.xlu0 %v698, 126
      %v703 = vpop.permute.xlu0 %702
      %704 = vrot.lane.b32.xlu0 %v699, 126
      %v705 = vpop.permute.xlu0 %704
      %v706 = vsel %vm444, %v703, %v705
      %v707 = vsel %vm444, %v705, %v703
      %v708 = vadd.f32 %v694, %v706
      %v709 = vadd.f32 %v695, %v707
      %v712 = vrot.slane %v708, 1
      %v713 = vrot.slane %v709, 1
      %716 = vrot.lane.b32.xlu0 %v712, 127
      %v717 = vpop.permute.xlu0 %716
      %718 = vrot.lane.b32.xlu0 %v713, 127
      %v719 = vpop.permute.xlu0 %718
      %v720 = vsel %vm459, %v717, %v719
      %v721 = vsel %vm459, %v719, %v717
      %v722 = vadd.f32 %v708, %v720
      %v723 = vadd.f32 %v709, %v721
      %v726 = vcombine.low %v722, %v723
      %v728 = vunpack.c.l.s4 1966171168
      %v729 = vunpack.c.0.s8 %v728
      %v730 = vlaneseq
      %v731 = vshrl.u32 %v730, 7
      %v732 = vsub.s32 %v729, %v731
      %v733 = vrot.slane %v726, %v732
      %v735 = vunpack.c.l.s4 1966171168
      %v736 = vunpack.c.0.s8 %v735
      %v737 = vlaneseq
      %v738 = vshrl.u32 %v737, 7
      %v739 = vsub.s32 %v736, %v738
      %v740 = vrot.slane %v733, %v739
      %s742 = scalar_lea.vmem %s219, 1
      %743 = vst.msk [vmem:[%s742] ss:$2 sm:$0x3] %vm485, %v740
      %p744 = scmp.lt.s32.totalorder %s14, 1
      %s745 = scalar_select %p744, %s14, 1
      %s746 = smul.addr %s745, 2
      %s747 = smul.addr %s746, 2
      %s748 = scalar_lea.vmem %s3, %s747
      // Predicated region
      $region33: #{siamfc_forward.1} parent=31 // pred_check
        %p749 = pneg %p110
      $region34: #{siamfc_forward.1} parent=31 // pred_check_branch
        %751 = sbr.rel (%p749) target = $region36
      $region35: #{siamfc_forward.1} parent=31 // pred_region
        _
      $region36: #{siamfc_forward.1} parent=31 // pred_fallthru
        _
    $region32: #{siamfc_forward.1} parent=5 // pred_fallthru
      _
    %p752 = scmp.le.s32.totalorder 2, %s9
    // Predicated region
    $region37: #{siamfc_forward.1} parent=5 // pred_check
      %p753 = pneg %p752
    $region38: #{siamfc_forward.1} parent=5 // pred_check_branch
      %755 = sbr.rel (%p753) target = $region40
    $region39: #{siamfc_forward.1} parent=5 // pred_region
      %s756 = ssub.s32 %s9, 2
      // Predicated region
      $region41: #{siamfc_forward.1} parent=39 // pred_check
        %p757 = pneg %p116
      $region42: #{siamfc_forward.1} parent=39 // pred_check_branch
        %759 = sbr.rel (%p757) target = $region44
      $region43: #{siamfc_forward.1} parent=39 // pred_region
        %p760 = scmp.lt.s32.totalorder %s15, 1
        %s761 = scalar_select %p760, %s15, 1
        %s762 = smul.addr %s761, 2
        %s763 = smul.addr %s762, 2
        %s764 = scalar_lea.vmem %s3, %s763
      $region44: #{siamfc_forward.1} parent=39 // pred_fallthru
        _
    $region40: #{siamfc_forward.1} parent=5 // pred_fallthru
      _
  $region6: #{siamfc_forward.1} parent=0 // loop_footer
    %s13 = sadd.s32 1, %s9
  $region7: #{siamfc_forward.1} parent=0 // loop_footer_branch
    %8 = sbr.rel target = $region3
  $region8: #{siamfc_forward.1} parent=0 // loop_exit
    _

</llo_original>
